<compile_context>
chip_gen: v7x
topology: tpu7x:2x2x1
jax: 0.10.0
libtpu: 0.0.40
codegen_flags: <defaults>
</compile_context>

<pallas_src>
import functools

import jax
import jax.numpy as jnp
from jax.experimental import pallas as pl
from jax.experimental.pallas import tpu as pltpu


def _round_up(x, m):
    return (x + m - 1) // m * m


def _pick_tile_b(batch, num_classes):
    """Batch tile: multiple of 8, roughly <= 1 MiB of f32 per input tile."""
    bytes_per_row = 4 * max(num_classes, 1)
    max_rows = max(8, ((1 << 20) // bytes_per_row) // 8 * 8)
    tile = min(max_rows, 512, _round_up(batch, 8))
    return max(8, int(tile))


def _ctkd_partial_kernel(temp_ref, s_ref, t_ref, lbl_ref, out_ref, *, batch):
    """Per-tile partial sums: out_ref[0,0] = sum_rows KL, out_ref[0,1] = sum_rows CE."""
    tile = pl.program_id(0)

    T = temp_ref[0, 0]
    inv_t = jnp.float32(1.0) / T                              # scalar 1/T

    s = s_ref[...].astype(jnp.float32)                        # [TB, C] student
    t = t_ref[...].astype(jnp.float32)                        # [TB, C] teacher
    tb, c = s.shape

    # Mask away padded batch rows (batch was rounded up to a multiple of TB).
    row_ids = tile * tb + jax.lax.broadcasted_iota(jnp.int32, (tb, 1), 0)
    valid = (row_ids < batch).astype(jnp.float32)             # [TB, 1]

    # Row maxima; the T=1 student max is reused for the tempered pass.
    s_max = jnp.max(s, axis=1, keepdims=True)                 # [TB, 1]
    t_max = jnp.max(t, axis=1, keepdims=True)                 # [TB, 1]
    s_shift = s - s_max
    t_shift = t - t_max

    # Student log-sum-exp at temperature T (shifted).
    es_t = jnp.exp(s_shift * inv_t)                           # [TB, C]
    lse_t = jnp.log(jnp.sum(es_t, axis=1, keepdims=True))     # [TB, 1]

    # Teacher tempered exponentials and normalizer.
    et = jnp.exp(t_shift * inv_t)                             # [TB, C]
    zt = jnp.sum(et, axis=1, keepdims=True)                   # [TB, 1]
    inv_zt = pl.reciprocal(zt, approx=False)                  # [TB, 1]
    log_zt = jnp.log(zt)                                      # [TB, 1]

    # KL(p || q) per row with p = softmax(t/T), log q = log_softmax(s/T):
    #   sum_c p_c (log p_c - log q_c)
    #     = (invT / Zt) * sum_c et_c * (t_shift_c - s_shift_c) + lse_T - log Zt
    cross = jnp.sum(et * (t_shift - s_shift), axis=1, keepdims=True)
    kl_row = inv_t * inv_zt * cross + lse_t - log_zt          # [TB, 1]

    # Cross-entropy at T = 1 without materializing log_softmax:
    #   ce_row = s_max + log sum exp(s - s_max) - s[label]
    e1 = jnp.exp(s_shift)
    lse1 = jnp.log(jnp.sum(e1, axis=1, keepdims=True))        # [TB, 1]
    labels = lbl_ref[...]                                     # [TB, 1] int32
    class_ids = jax.lax.broadcasted_iota(jnp.int32, (tb, c), 1)
    onehot = (class_ids == labels).astype(jnp.float32)
    picked = jnp.sum(onehot * s, axis=1, keepdims=True)       # [TB, 1]
    ce_row = s_max + lse1 - picked                            # [TB, 1]

    out_ref[0, 0] = jnp.sum(kl_row * valid)
    out_ref[0, 1] = jnp.sum(ce_row * valid)


def ctkd_loss_pallas(student_logits, teacher_logits, true_labels, temperature, alpha,
                     tile_b=None):
    """CTKD loss: alpha * KL(batchmean) + (1 - alpha) * CE, one gridded Pallas kernel."""
    batch, num_classes = student_logits.shape
    if tile_b is None:
        tile_b = _pick_tile_b(batch, num_classes)
    assert tile_b % 8 == 0
    batch_pad = _round_up(batch, tile_b)
    num_tiles = batch_pad // tile_b

    labels = true_labels.reshape(-1).astype(jnp.int32)
    if batch_pad != batch:
        pad = batch_pad - batch
        student_logits = jnp.pad(student_logits, ((0, pad), (0, 0)))
        teacher_logits = jnp.pad(teacher_logits, ((0, pad), (0, 0)))
        labels = jnp.pad(labels, ((0, pad),))
    labels2d = labels.reshape(batch_pad, 1)
    temp = jnp.array([[temperature]], dtype=jnp.float32)

    cost = pl.CostEstimate(
        flops=12 * batch_pad * num_classes,
        transcendentals=3 * batch_pad * num_classes + 4 * batch_pad,
        bytes_accessed=4 * (2 * batch_pad * num_classes + batch_pad) + 8 * num_tiles,
    )

    partials = pl.pallas_call(
        functools.partial(_ctkd_partial_kernel, batch=batch),
        out_shape=jax.ShapeDtypeStruct((num_tiles, 2), jnp.float32),
        grid=(num_tiles,),
        in_specs=[
            pl.BlockSpec((1, 1), lambda i: (0, 0),
                         memory_space=pltpu.MemorySpace.SMEM),      # temperature scalar
            pl.BlockSpec((tile_b, num_classes), lambda i: (i, 0)),  # student logits
            pl.BlockSpec((tile_b, num_classes), lambda i: (i, 0)),  # teacher logits
            pl.BlockSpec((tile_b, 1), lambda i: (i, 0)),            # labels
        ],
        out_specs=pl.BlockSpec((1, 2), lambda i: (i, 0),
                               memory_space=pltpu.MemorySpace.SMEM),
        compiler_params=pltpu.CompilerParams(
            dimension_semantics=("parallel",),
            vmem_limit_bytes=32 * 1024 * 1024,
        ),
        cost_estimate=cost,
    )(temp, student_logits, teacher_logits, labels2d)

    kl = jnp.sum(partials[:, 0]) / jnp.float32(batch)
    ce = jnp.sum(partials[:, 1]) / jnp.float32(batch)
    # NOTE: matches the PyTorch spec exactly (no T^2 scaling of the KL term).
    return jnp.float32(alpha) * kl + jnp.float32(1.0 - alpha) * ce


class CTKD:
    """JAX/Pallas port of the PyTorch CTKD module (stateful temperature schedule)."""

    def __init__(self, temperature=1.0, max_temp=5.0, total_steps=1870, alpha=0.8):
        self.temperature = temperature
        self.max_temp = max_temp
        self.alpha = alpha
        self.total_steps = total_steps
        self.current_step = 0

    def update_temperature(self):
        progress = min(self.current_step / self.total_steps, 1.0)
        self.temperature = self.temperature + (self.max_temp - self.temperature) * progress

    def __call__(self, student_logits, teacher_logits, true_labels):
        self.update_temperature()
        self.current_step += 1
        return ctkd_loss_pallas(
            student_logits, teacher_logits, true_labels,
            self.temperature, self.alpha,
        )


def _reference(student_logits, teacher_logits, true_labels, T, alpha):
    B = student_logits.shape[0]
    p = jax.nn.softmax(teacher_logits / T, axis=1)
    log_q = jax.nn.log_softmax(student_logits / T, axis=1)
    kl = jnp.sum(p * (jnp.log(p) - log_q)) / B
    log_q1 = jax.nn.log_softmax(student_logits, axis=1)
    ce = -jnp.mean(log_q1[jnp.arange(B), true_labels])
    return alpha * kl + (1.0 - alpha) * ce


if __name__ == "__main__":
    key = jax.random.PRNGKey(0)

    # --- primary check: module semantics at step 0 (T = 1.0), B=8, C=32 ---
    B, C = 8, 32
    k1, k2, k3, k4, k5, k6 = jax.random.split(key, 6)
    student_logits = jax.random.normal(k1, (B, C), dtype=jnp.float32)
    teacher_logits = jax.random.normal(k2, (B, C), dtype=jnp.float32)
    true_labels = jax.random.randint(k3, (B,), 0, C, dtype=jnp.int32)

    module = CTKD(temperature=1.0, max_temp=5.0, total_steps=1870, alpha=0.8)
    loss = module(student_logits, teacher_logits, true_labels)
    jax.block_until_ready(loss)
    ref = _reference(student_logits, teacher_logits, true_labels, 1.0, 0.8)
    assert jnp.allclose(loss, ref, rtol=1e-4, atol=1e-5), (loss, ref)

    # --- secondary check: multi-tile grid + batch padding/masking, T != 1 ---
    B2, C2, T2, a2 = 20, 32, 2.0, 0.8
    s2 = jax.random.normal(k4, (B2, C2), dtype=jnp.float32)
    t2 = jax.random.normal(k5, (B2, C2), dtype=jnp.float32)
    y2 = jax.random.randint(k6, (B2,), 0, C2, dtype=jnp.int32)
    loss2 = ctkd_loss_pallas(s2, t2, y2, T2, a2, tile_b=8)   # 3 grid steps, 4 padded rows
    jax.block_until_ready(loss2)
    ref2 = _reference(s2, t2, y2, T2, a2)
    assert jnp.allclose(loss2, ref2, rtol=1e-4, atol=1e-5), (loss2, ref2)

    print("KERNEL_OK")
</pallas_src>

<mosaic_0001>
module attributes {stable_mosaic.version = 11 : i64} {
  func.func @_ctkd_partial_kernel(%arg0: i32, %arg1: memref<1x1xf32, #tpu.memory_space<smem>>, %arg2: memref<8x32xf32, #tpu.memory_space<vmem>>, %arg3: memref<8x32xf32, #tpu.memory_space<vmem>>, %arg4: memref<8x1xi32, #tpu.memory_space<vmem>>, %arg5: memref<1x2xf32, #tpu.memory_space<smem>>) attributes {dimension_semantics = [#tpu.dimension_semantics<parallel>], iteration_bounds = array<i64: 1>, scalar_prefetch = 0 : i64, scratch_operands = 0 : i64, tpu.core_type = #tpu.core_type<tc>, window_params = [{transform_indices = @transform_0, window_bounds = array<i64: 1, 1>}, {transform_indices = @transform_1, window_bounds = array<i64: 8, 32>}, {transform_indices = @transform_2, window_bounds = array<i64: 8, 32>}, {transform_indices = @transform_3, window_bounds = array<i64: 8, 1>}, {transform_indices = @transform_4, window_bounds = array<i64: 1, 2>}]} {
    %c0 = arith.constant 0 : index
    %c0_0 = arith.constant 0 : index
    %0 = memref.load %arg1[%c0, %c0_0] : memref<1x1xf32, #tpu.memory_space<smem>>
    %cst = arith.constant 1.000000e+00 : f32
    %1 = arith.divf %cst, %0 : f32
    %c0_1 = arith.constant 0 : index
    %c0_2 = arith.constant 0 : index
    %2 = vector.load %arg2[%c0_1, %c0_2] : memref<8x32xf32, #tpu.memory_space<vmem>>, vector<8x32xf32>
    %c0_3 = arith.constant 0 : index
    %c0_4 = arith.constant 0 : index
    %3 = vector.load %arg3[%c0_3, %c0_4] : memref<8x32xf32, #tpu.memory_space<vmem>>, vector<8x32xf32>
    %c8_i32 = arith.constant 8 : i32
    %4 = arith.muli %arg0, %c8_i32 : i32
    %5 = tpu.iota {dimensions = array<i32: 0>} : vector<8x1xi32>
    %6 = vector.broadcast %4 : i32 to vector<8x1xi32>
    %7 = arith.addi %6, %5 : vector<8x1xi32>
    %c8_i32_5 = arith.constant 8 : i32
    %8 = vector.broadcast %c8_i32_5 : i32 to vector<8x1xi32>
    %9 = arith.cmpi slt, %7, %8 : vector<8x1xi32>
    %10 = arith.extui %9 : vector<8x1xi1> to vector<8x1xi32>
    %11 = arith.sitofp %10 : vector<8x1xi32> to vector<8x1xf32>
    %cst_6 = arith.constant dense<0xFF800000> : vector<8xf32>
    %12 = vector.multi_reduction <maximumf>, %2, %cst_6 [1] : vector<8x32xf32> to vector<8xf32>
    %13 = vector.shape_cast %12 : vector<8xf32> to vector<8x1xf32>
    %cst_7 = arith.constant dense<0xFF800000> : vector<8xf32>
    %14 = vector.multi_reduction <maximumf>, %3, %cst_7 [1] : vector<8x32xf32> to vector<8xf32>
    %15 = vector.shape_cast %14 : vector<8xf32> to vector<8x1xf32>
    %16 = vector.broadcast %13 : vector<8x1xf32> to vector<8x32xf32>
    %17 = arith.subf %2, %16 : vector<8x32xf32>
    %18 = vector.broadcast %15 : vector<8x1xf32> to vector<8x32xf32>
    %19 = arith.subf %3, %18 : vector<8x32xf32>
    %20 = vector.broadcast %1 : f32 to vector<8x32xf32>
    %21 = arith.mulf %17, %20 : vector<8x32xf32>
    %22 = math.exp %21 : vector<8x32xf32>
    %cst_8 = arith.constant dense<0.000000e+00> : vector<8xf32>
    %23 = vector.multi_reduction <add>, %22, %cst_8 [1] : vector<8x32xf32> to vector<8xf32>
    %24 = vector.shape_cast %23 : vector<8xf32> to vector<8x1xf32>
    %25 = math.log %24 : vector<8x1xf32>
    %26 = vector.broadcast %1 : f32 to vector<8x32xf32>
    %27 = arith.mulf %19, %26 : vector<8x32xf32>
    %28 = math.exp %27 : vector<8x32xf32>
    %cst_9 = arith.constant dense<0.000000e+00> : vector<8xf32>
    %29 = vector.multi_reduction <add>, %28, %cst_9 [1] : vector<8x32xf32> to vector<8xf32>
    %30 = vector.shape_cast %29 : vector<8xf32> to vector<8x1xf32>
    %31 = tpu.reciprocal %30 : vector<8x1xf32> -> vector<8x1xf32>
    %32 = math.log %30 : vector<8x1xf32>
    %33 = arith.subf %19, %17 : vector<8x32xf32>
    %34 = arith.mulf %28, %33 : vector<8x32xf32>
    %cst_10 = arith.constant dense<0.000000e+00> : vector<8xf32>
    %35 = vector.multi_reduction <add>, %34, %cst_10 [1] : vector<8x32xf32> to vector<8xf32>
    %36 = vector.shape_cast %35 : vector<8xf32> to vector<8x1xf32>
    %37 = vector.broadcast %1 : f32 to vector<8x1xf32>
    %38 = arith.mulf %37, %31 : vector<8x1xf32>
    %39 = arith.mulf %38, %36 : vector<8x1xf32>
    %40 = arith.addf %39, %25 : vector<8x1xf32>
    %41 = arith.subf %40, %32 : vector<8x1xf32>
    %42 = math.exp %17 : vector<8x32xf32>
    %cst_11 = arith.constant dense<0.000000e+00> : vector<8xf32>
    %43 = vector.multi_reduction <add>, %42, %cst_11 [1] : vector<8x32xf32> to vector<8xf32>
    %44 = vector.shape_cast %43 : vector<8xf32> to vector<8x1xf32>
    %45 = math.log %44 : vector<8x1xf32>
    %c0_12 = arith.constant 0 : index
    %c0_13 = arith.constant 0 : index
    %46 = vector.load %arg4[%c0_12, %c0_13] : memref<8x1xi32, #tpu.memory_space<vmem>>, vector<8x1xi32>
    %47 = tpu.iota {dimensions = array<i32: 1>} : vector<8x32xi32>
    %48 = vector.broadcast %46 : vector<8x1xi32> to vector<8x32xi32>
    %49 = arith.cmpi eq, %47, %48 : vector<8x32xi32>
    %50 = arith.extui %49 : vector<8x32xi1> to vector<8x32xi32>
    %51 = arith.sitofp %50 : vector<8x32xi32> to vector<8x32xf32>
    %52 = arith.mulf %51, %2 : vector<8x32xf32>
    %cst_14 = arith.constant dense<0.000000e+00> : vector<8xf32>
    %53 = vector.multi_reduction <add>, %52, %cst_14 [1] : vector<8x32xf32> to vector<8xf32>
    %54 = vector.shape_cast %53 : vector<8xf32> to vector<8x1xf32>
    %55 = arith.addf %13, %45 : vector<8x1xf32>
    %56 = arith.subf %55, %54 : vector<8x1xf32>
    %57 = arith.mulf %41, %11 : vector<8x1xf32>
    %58 = vector.shape_cast %57 : vector<8x1xf32> to vector<1x8x1xf32>
    %cst_15 = arith.constant dense<0.000000e+00> : vector<1xf32>
    %59 = vector.multi_reduction <add>, %58, %cst_15 [1, 2] : vector<1x8x1xf32> to vector<1xf32>
    %60 = vector.shape_cast %59 : vector<1xf32> to vector<1x1x1xf32>
    %61 = vector.extract %60[0, 0, 0] : f32 from vector<1x1x1xf32>
    %c0_16 = arith.constant 0 : index
    %c0_17 = arith.constant 0 : index
    %62 = memref.load %arg5[%c0_16, %c0_17] : memref<1x2xf32, #tpu.memory_space<smem>>
    memref.store %61, %arg5[%c0_16, %c0_17] : memref<1x2xf32, #tpu.memory_space<smem>>
    %63 = arith.mulf %56, %11 : vector<8x1xf32>
    %64 = vector.shape_cast %63 : vector<8x1xf32> to vector<1x8x1xf32>
    %cst_18 = arith.constant dense<0.000000e+00> : vector<1xf32>
    %65 = vector.multi_reduction <add>, %64, %cst_18 [1, 2] : vector<1x8x1xf32> to vector<1xf32>
    %66 = vector.shape_cast %65 : vector<1xf32> to vector<1x1x1xf32>
    %67 = vector.extract %66[0, 0, 0] : f32 from vector<1x1x1xf32>
    %c0_19 = arith.constant 0 : index
    %c1 = arith.constant 1 : index
    %68 = memref.load %arg5[%c0_19, %c1] : memref<1x2xf32, #tpu.memory_space<smem>>
    memref.store %67, %arg5[%c0_19, %c1] : memref<1x2xf32, #tpu.memory_space<smem>>
    return
  }
  func.func @transform_0(%arg0: i32) -> (i32, i32) {
    %c0_i32 = arith.constant 0 : i32
    %c0_i32_0 = arith.constant 0 : i32
    %c0_i32_1 = arith.constant 0 : i32
    return %c0_i32, %c0_i32_0 : i32, i32
  }
  func.func @transform_1(%arg0: i32) -> (i32, i32) {
    %c0_i32 = arith.constant 0 : i32
    %c0_i32_0 = arith.constant 0 : i32
    return %arg0, %c0_i32 : i32, i32
  }
  func.func @transform_2(%arg0: i32) -> (i32, i32) {
    %c0_i32 = arith.constant 0 : i32
    %c0_i32_0 = arith.constant 0 : i32
    return %arg0, %c0_i32 : i32, i32
  }
  func.func @transform_3(%arg0: i32) -> (i32, i32) {
    %c0_i32 = arith.constant 0 : i32
    %c0_i32_0 = arith.constant 0 : i32
    return %arg0, %c0_i32 : i32, i32
  }
  func.func @transform_4(%arg0: i32) -> (i32, i32) {
    %c0_i32 = arith.constant 0 : i32
    %c0_i32_0 = arith.constant 0 : i32
    return %arg0, %c0_i32 : i32, i32
  }
}

</mosaic_0001>

<llo_original>
// kernel: tpu_custom_call.1
$region0: #{tpu_custom_call.1}
  #allocation0 [shape = 'u32[]', space=smem, size = 0x4, offset = 0x4, fixed_abs, tag = 'smem constant byte address 0x4 - core index']
  #allocation1 [shape = 'u32[144,128]{1,0:T(1,128)}', space=vmem, size = 0x12000, scoped, tag = 'internal scratch']
  #allocation2 [shape = 'f32[1,1]{1,0:T(1,128)S(6)}', space=smem, size = 0x200, scoped, tag = 'scoped memory for tpu_custom_call.1']
  %s0 = inlined_call_operand.<no memory space> [shape: f32[1,1], index: 0, kind: input, shape index: {}]
  %s1 = inlined_call_operand.vmem [shape: f32[8,32], index: 1, kind: input, shape index: {}]
  %s2 = inlined_call_operand.vmem [shape: f32[8,32], index: 2, kind: input, shape index: {}]
  %s3 = inlined_call_operand.vmem [shape: s32[8,1], index: 3, kind: input, shape index: {}]
  %s4 = inlined_call_operand.hbm [shape: f32[1,2], index: 4, kind: output, shape index: {}]
  %s5 = sld [smem:[#allocation0]]
  $region26: #{tpu_custom_call.1} parent=0
    _
  %s7 = ssub.s32 1, %s5
  %s8 = scalar_select 0, %s7, %s5
  %9 = sst [smem:[#allocation2]] %s0
  $region1: #{tpu_custom_call.1} parent=0
    #allocation3 [shape = 'u8[512]{0}', space=smem, size = 0x200, scoped, tag = 'output window, operand 0, single buffered']
    #allocation4 [shape = 's32[1]{0}', space=sflag, size = 0x4, scoped, tag = 'scoped memory for tpu_custom_call.1']
    %10 = vsyncpa [#allocation4], 0
    // Predicated region
    $region2: #{tpu_custom_call.1} parent=1 // pred_check
      _
    $region3: #{tpu_custom_call.1} parent=1 // pred_check_branch
      %12 = sbr.rel (0) target = $region5
    $region4: #{tpu_custom_call.1} parent=1 // pred_region
      _
    $region5: #{tpu_custom_call.1} parent=1 // pred_fallthru
      _
    // Predicated region
    $region6: #{tpu_custom_call.1} parent=1 // pred_check
      _
    $region7: #{tpu_custom_call.1} parent=1 // pred_check_branch
      %14 = sbr.rel (0) target = $region9
    $region8: #{tpu_custom_call.1} parent=1 // pred_region
      _
    $region9: #{tpu_custom_call.1} parent=1 // pred_fallthru
      _
    // Predicated region
    $region10: #{tpu_custom_call.1} parent=1 // pred_check
      _
    $region11: #{tpu_custom_call.1} parent=1 // pred_check_branch
      %16 = sbr.rel (0) target = $region13
    $region12: #{tpu_custom_call.1} parent=1 // pred_region
      _
    $region13: #{tpu_custom_call.1} parent=1 // pred_fallthru
      _
    // Predicated region
    $region14: #{tpu_custom_call.1} parent=1 // pred_check
      _
    $region15: #{tpu_custom_call.1} parent=1 // pred_check_branch
      %18 = sbr.rel (0) target = $region17
    $region16: #{tpu_custom_call.1} parent=1 // pred_region
      _
    $region17: #{tpu_custom_call.1} parent=1 // pred_fallthru
      _
    %s19 = sld [smem:[#allocation2]]
    %v20 = vstv %s19
    %v21 = vrcp.pop %v20
    %s22 = vtos %v21
    %v23 = vld [vmem:[%s1] sm:$0xff]
    %v24 = vld [vmem:[%s2] sm:$0xff]
    %s25 = smul.u32 0, 8
    %v26 = vlaneseq
    %v27 = vshrl.u32 %v26, 7
    %v28 = vstv %s25
    %v29 = vadd.s32 %v28, %v27
    %vm30 = vcmp.lt.s32.totalorder %v29, 8
    %v31 = vsel %vm30, 1, 0
    %v32 = vcvt.s32.f32 %v31
    %vm33 = vcmask 261120
    %v34 = vsel %vm33, %v23, -inf
    %35 = vmax.xlane.f32.xlu0 %v34
    %v36 = vpop.xlane.xlu0 %35
    %v37 = vsel %vm33, %v24, -inf
    %38 = vmax.xlane.f32.xlu0 %v37
    %v39 = vpop.xlane.xlu0 %38
    %v40 = vsub.f32 %v23, %v36
    %v41 = vsub.f32 %v24, %v39
    %v42 = vstv %s22
    %v43 = vmul.f32 %v40, %v42
    %v44 = vmul.f32 %v43, 1.442695
    %v45 = vpow.pop %v44
    %v46 = vsel %vm33, %v45, 0.0
    %47 = vadd.xlane.f32.xlu0 %v46
    %v48 = vpop.xlane.xlu0 %47
    %v49 = vlog2.pop %v48
    %v50 = vmul.f32 %v49, 0.6931472
    %v51 = vmul.f32 %v41, %v42
    %v52 = vmul.f32 %v51, 1.442695
    %v53 = vpow.pop %v52
    %v54 = vsel %vm33, %v53, 0.0
    %55 = vadd.xlane.f32.xlu0 %v54
    %v56 = vpop.xlane.xlu0 %55
    %v57 = vrcp.pop %v56
    %v58 = vlog2.pop %v56
    %v59 = vmul.f32 %v58, 0.6931472
    %v60 = vsub.f32 %v41, %v40
    %v61 = vmul.f32 %v53, %v60
    %v62 = vsel %vm33, %v61, 0.0
    %63 = vadd.xlane.f32.xlu0 %v62
    %v64 = vpop.xlane.xlu0 %63
    %v65 = vmul.f32 %v42, %v57
    %v66 = vmul.f32 %v65, %v64
    %v67 = vadd.f32 %v66, %v50
    %v68 = vsub.f32 %v67, %v59
    %v69 = vmul.f32 %v40, 1.442695
    %v70 = vpow.pop %v69
    %v71 = vsel %vm33, %v70, 0.0
    %72 = vadd.xlane.f32.xlu0 %v71
    %v73 = vpop.xlane.xlu0 %72
    %v74 = vlog2.pop %v73
    %v75 = vmul.f32 %v74, 0.6931472
    %v76 = vld [vmem:[%s3] sm:$0xff]
    %v77 = vlaneseq
    %v78 = vand.u32 %v77, 127
    %79 = vset.pattern.permute.xlu0 0
    %80 = vperm.xlu0 %79, %v76
    %v81 = vpop.permute.xlu0 %80
    %vm82 = vcmp.eq.s32.totalorder %v78, %v81
    %v83 = vsel %vm82, 1, 0
    %v84 = vcvt.s32.f32 %v83
    %v85 = vmul.f32 %v84, %v23
    %v86 = vsel %vm33, %v85, 0.0
    %87 = vadd.xlane.f32.xlu0 %v86
    %v88 = vpop.xlane.xlu0 %87
    %v89 = vadd.f32 %v36, %v75
    %v90 = vsub.f32 %v89, %v88
    %v91 = vmul.f32 %v68, %v32
    %vm92 = vcmask 7168
    %v93 = vsel %vm92, %v91, 0.0
    %94 = vadd.xlane.f32.xlu0 %v93
    %v95 = vpop.xlane.xlu0 %94
    %v96 = vrot.slane %v95, 4
    %v97 = vadd.f32 %v95, %v96
    %v98 = vrot.slane %v97, 2
    %v99 = vadd.f32 %v97, %v98
    %v100 = vrot.slane %v99, 1
    %v101 = vadd.f32 %v99, %v100
    %s102 = vtos %v101
    %s103 = scalar_lea.smem [#allocation3], 0
    %104 = sst [smem:[%s103]] %s102
    %v105 = vmul.f32 %v90, %v32
    %v106 = vsel %vm92, %v105, 0.0
    %107 = vadd.xlane.f32.xlu0 %v106
    %v108 = vpop.xlane.xlu0 %107
    %v109 = vrot.slane %v108, 4
    %v110 = vadd.f32 %v108, %v109
    %v111 = vrot.slane %v110, 2
    %v112 = vadd.f32 %v110, %v111
    %v113 = vrot.slane %v112, 1
    %v114 = vadd.f32 %v112, %v113
    %s115 = vtos %v114
    %s116 = scalar_lea.smem [#allocation3], 1
    %117 = sst [smem:[%s116]] %s115
    // Predicated region
    $region18: #{tpu_custom_call.1} parent=1 // pred_check
      _
    $region19: #{tpu_custom_call.1} parent=1 // pred_check_branch
      %119 = sbr.rel (0) target = $region21
    $region20: #{tpu_custom_call.1} parent=1 // pred_region
      %s121 = ssub.s32 16, 16
      %122 = vsyncadd [#allocation4], %s121
      %125 = dma.smem_to_hbm [#allocation3], 16, %s4, [#allocation4]
    $region21: #{tpu_custom_call.1} parent=1 // pred_fallthru
      _
    // Predicated region
    $region22: #{tpu_custom_call.1} parent=1 // pred_check
      _
    $region23: #{tpu_custom_call.1} parent=1 // pred_check_branch
      %127 = sbr.rel (0) target = $region25
    $region24: #{tpu_custom_call.1} parent=1 // pred_region
      %128 = dma.done [#allocation4], 16
    $region25: #{tpu_custom_call.1} parent=1 // pred_fallthru
      _
    %129 = sfence
    %130 = vsyncpa [#allocation4], 1

</llo_original>
